<compile_context>
chip_gen: v7x
topology: tpu7x:2x2x1
jax: 0.10.0
libtpu: 0.0.40
codegen_flags: <defaults>
</compile_context>

<pallas_src>
from math import ceil

import jax
import jax.numpy as jnp
from jax import lax
from jax.experimental import pallas as pl
from jax.experimental.pallas import tpu as pltpu


def _round_up(x, m):
    return ((x + m - 1) // m) * m


def _make_conv_block_kernel(kh, kw, W, cin_pad, wide, negative_slope):
    """Single-step kernel: build im2col operand in VMEM, one fused MXU dot, fused epilogue."""
    taps = [(i, j) for i in range(kh) for j in range(kw)]

    def kernel(x_ref, w_ref, ss_ref, o_ref, cols_ref):
        # x_ref:    (cin_pad, total_lanes)  all N images lane-packed (stride HWp), zero-padded
        # w_ref:    (Cout, kh*kw*cin_pad)   conv taps flattened tap-major, Cin zero-padded
        # ss_ref:   (Cout, 2)               [:, 0] = BN scale, [:, 1] = BN shift (eval fold)
        # o_ref:    (Cout, wide)            "wide" output rows; invalid columns dropped by caller
        # cols_ref: (kh*kw*cin_pad, wide)   VMEM scratch: im2col operand, built once per step
        for t, (i, j) in enumerate(taps):
            start = i * W + j                                   # static lane offset (<= 128)
            # Sublane-aligned block writes (cin_pad multiple of 8) -> cheap dense copies.
            cols_ref[t * cin_pad:(t + 1) * cin_pad, :] = x_ref[:, start:start + wide]
        # One fused MXU dot over all kh*kw taps (K = kh*kw*cin_pad) instead of 9 tiny pushes.
        acc = jnp.dot(w_ref[...], cols_ref[...], preferred_element_type=jnp.float32)
        # Dropout2d: identity in eval mode (deterministic forward).
        act = jnp.where(acc >= 0, acc, negative_slope * acc)    # LeakyReLU (f32)
        # BatchNorm2d (eval): per-output-channel affine, broadcast over the lane dim.
        o_ref[...] = (act * ss_ref[:, 0:1] + ss_ref[:, 1:2]).astype(o_ref.dtype)

    return kernel


def conv_block_2d(x_nchw, weight, gamma, beta, running_mean, running_var,
                  *, eps=1e-5, negative_slope=0.01):
    """Pallas implementation of _ConvBlock2D forward (eval mode, residual=False)."""
    N, Cin, H, W = x_nchw.shape
    Cout, Cin_w, kh, kw = weight.shape
    assert Cin_w == Cin, "groups=1 only"
    OH, OW = H - kh + 1, W - kw + 1

    cin_pad = _round_up(Cin, 8)            # 8-sublane-aligned tap blocks in the im2col operand
    HWp = _round_up(H * W, 128)            # per-image lane stride (>= H*W)
    wide = N * HWp                         # output lane width: multiple of 128 -> unmasked stores
    max_start = (kh - 1) * W + (kw - 1)    # largest shifted-slice start offset
    total = wide + (_round_up(max_start, 128) if max_start else 0)

    # --- glue (all tiny, single pass) ---
    # x (N, Cin, H, W) -> (cin_pad, total): images laid side by side along lanes.
    x_flat = x_nchw.reshape(N, Cin, H * W).astype(jnp.float32)
    x_flat = jnp.pad(x_flat, ((0, 0), (0, 0), (0, HWp - H * W)))
    x_packed = jnp.transpose(x_flat, (1, 0, 2)).reshape(Cin, wide)
    x_packed = jnp.pad(x_packed, ((0, cin_pad - Cin), (0, total - wide)))

    # weight (Cout, Cin, kh, kw) -> (Cout, kh*kw*cin_pad), tap-major, Cin zero-padded.
    w_flat = jnp.transpose(weight, (0, 2, 3, 1)).astype(jnp.float32)
    w_flat = jnp.pad(w_flat, ((0, 0), (0, 0), (0, 0), (0, cin_pad - Cin)))
    w_flat = w_flat.reshape(Cout, kh * kw * cin_pad)

    # BatchNorm (eval) folded into one (Cout, 2) scale/shift table -> single tiny DMA.
    inv_std = gamma / jnp.sqrt(running_var + eps)
    ss = jnp.stack([inv_std, beta - running_mean * inv_std], axis=1).astype(jnp.float32)

    cost = pl.CostEstimate(
        flops=2 * N * Cout * Cin * kh * kw * OH * OW,
        transcendentals=0,
        bytes_accessed=4 * (x_packed.size + w_flat.size + ss.size + Cout * wide),
    )

    out_wide = pl.pallas_call(
        _make_conv_block_kernel(kh, kw, W, cin_pad, wide, negative_slope),
        out_shape=jax.ShapeDtypeStruct((Cout, wide), jnp.float32),
        grid_spec=pltpu.PrefetchScalarGridSpec(
            num_scalar_prefetch=0,
            grid=(1,),                      # single step: the batch lives in the lane dim
            in_specs=[
                pl.BlockSpec((cin_pad, total), lambda n: (0, 0)),
                pl.BlockSpec((Cout, kh * kw * cin_pad), lambda n: (0, 0)),
                pl.BlockSpec((Cout, 2), lambda n: (0, 0)),
            ],
            out_specs=pl.BlockSpec((Cout, wide), lambda n: (0, 0)),
            scratch_shapes=[pltpu.VMEM((kh * kw * cin_pad, wide), jnp.float32)],
        ),
        compiler_params=pltpu.CompilerParams(
            dimension_semantics=("arbitrary",),
            vmem_limit_bytes=32 * 1024 * 1024,
        ),
        cost_estimate=cost,
    )(x_packed, w_flat, ss)

    # Tiny XLA epilogue (~14 KiB): drop per-image pad + wrap-around columns, restore NCHW.
    out = out_wide.reshape(Cout, N, HWp)[:, :, :OH * W]
    out = out.reshape(Cout, N, OH, W)[..., :OW]
    return jnp.transpose(out, (1, 0, 2, 3))


def _reference(x_nchw, weight, gamma, beta, running_mean, running_var,
               *, eps=1e-5, negative_slope=0.01):
    """Pure-JAX reference of the same eval-mode forward pass."""
    y = lax.conv_general_dilated(
        x_nchw, weight, window_strides=(1, 1), padding="VALID",
        dimension_numbers=("NCHW", "OIHW", "NCHW"),
        precision=lax.Precision.HIGHEST)
    y = jnp.where(y >= 0, y, negative_slope * y)
    scale = gamma / jnp.sqrt(running_var + eps)
    shift = beta - running_mean * scale
    return y * scale[None, :, None, None] + shift[None, :, None, None]


if __name__ == "__main__":
    key = jax.random.PRNGKey(0)
    k_x, k_w, k_g, k_b, k_m, k_v = jax.random.split(key, 6)

    # _ConvBlock2D(in_filters=4, out_filters=8, kernel=(3, 3)) with default args.
    N, Cin, H, W = 2, 4, 16, 16
    Cout, kh, kw = 8, 3, 3

    x = jax.random.normal(k_x, (N, Cin, H, W), dtype=jnp.float32)

    # Conv2d default init (kaiming_uniform, a=sqrt(5)) -> U(-b, b), b = 1/sqrt(fan_in).
    fan_in = Cin * kh * kw
    bound = 1.0 / (fan_in ** 0.5)
    weight = jax.random.uniform(k_w, (Cout, Cin, kh, kw),
                                minval=-bound, maxval=bound, dtype=jnp.float32)

    # BatchNorm2d params: PyTorch defaults are gamma=1/beta=0/mean=0/var=1; use slightly
    # perturbed (as-if-trained) eval statistics so the fused scale/shift path is exercised.
    gamma = 1.0 + 0.1 * jax.random.normal(k_g, (Cout,), dtype=jnp.float32)
    beta = 0.1 * jax.random.normal(k_b, (Cout,), dtype=jnp.float32)
    running_mean = 0.1 * jax.random.normal(k_m, (Cout,), dtype=jnp.float32)
    running_var = jax.random.uniform(k_v, (Cout,), minval=0.5, maxval=1.5,
                                     dtype=jnp.float32)

    ref = _reference(x, weight, gamma, beta, running_mean, running_var)

    out = conv_block_2d(x, weight, gamma, beta, running_mean, running_var)
    out = jax.block_until_ready(out)
    assert out.shape == (N, Cout, H - kh + 1, W - kw + 1), out.shape
    assert jnp.allclose(out, ref, atol=2e-3, rtol=2e-3), "mismatch vs reference"

    # TODO(synk): training-mode Dropout2d / batch-statistics BN (stochastic, batch-dependent)
    # and the residual=True (_BatchNormZG + skip-add) path are not reproduced; eval-mode
    # semantics with the default residual=False are implemented.
    print("KERNEL_OK")
</pallas_src>

<mosaic_0001>
module attributes {stable_mosaic.version = 11 : i64} {
  func.func @kernel(%arg0: i32, %arg1: memref<8x640xf32, #tpu.memory_space<vmem>>, %arg2: memref<8x72xf32, #tpu.memory_space<vmem>>, %arg3: memref<8x2xf32, #tpu.memory_space<vmem>>, %arg4: memref<8x512xf32, #tpu.memory_space<vmem>>, %arg5: memref<72x512xf32, #tpu.memory_space<vmem>>) attributes {dimension_semantics = [#tpu.dimension_semantics<arbitrary>], iteration_bounds = array<i64: 1>, scalar_prefetch = 0 : i64, scratch_operands = 1 : i64, tpu.core_type = #tpu.core_type<tc>, window_params = [{pipeline_mode = #tpu.pipeline_mode<synchronous>, transform_indices = @transform_0, window_bounds = array<i64: 8, 640>}, {pipeline_mode = #tpu.pipeline_mode<synchronous>, transform_indices = @transform_1, window_bounds = array<i64: 8, 72>}, {pipeline_mode = #tpu.pipeline_mode<synchronous>, transform_indices = @transform_2, window_bounds = array<i64: 8, 2>}, {pipeline_mode = #tpu.pipeline_mode<synchronous>, transform_indices = @transform_3, window_bounds = array<i64: 8, 512>}]} {
    %c0 = arith.constant 0 : index
    %c0_0 = arith.constant 0 : index
    %0 = vector.load %arg1[%c0, %c0_0] : memref<8x640xf32, #tpu.memory_space<vmem>>, vector<8x512xf32>
    %c0_1 = arith.constant 0 : index
    %c0_2 = arith.constant 0 : index
    %1 = vector.load %arg5[%c0_1, %c0_2] : memref<72x512xf32, #tpu.memory_space<vmem>>, vector<8x512xf32>
    tpu.vector_store %arg5[%c0_1, %c0_2], %0 {strides = array<i32>} : memref<72x512xf32, #tpu.memory_space<vmem>>, vector<8x512xf32>,
    %c0_3 = arith.constant 0 : index
    %c1 = arith.constant 1 : index
    %2 = vector.load %arg1[%c0_3, %c1] : memref<8x640xf32, #tpu.memory_space<vmem>>, vector<8x512xf32>
    %c8 = arith.constant 8 : index
    %c0_4 = arith.constant 0 : index
    %3 = vector.load %arg5[%c8, %c0_4] : memref<72x512xf32, #tpu.memory_space<vmem>>, vector<8x512xf32>
    tpu.vector_store %arg5[%c8, %c0_4], %2 {strides = array<i32>} : memref<72x512xf32, #tpu.memory_space<vmem>>, vector<8x512xf32>,
    %c0_5 = arith.constant 0 : index
    %c2 = arith.constant 2 : index
    %4 = vector.load %arg1[%c0_5, %c2] : memref<8x640xf32, #tpu.memory_space<vmem>>, vector<8x512xf32>
    %c16 = arith.constant 16 : index
    %c0_6 = arith.constant 0 : index
    %5 = vector.load %arg5[%c16, %c0_6] : memref<72x512xf32, #tpu.memory_space<vmem>>, vector<8x512xf32>
    tpu.vector_store %arg5[%c16, %c0_6], %4 {strides = array<i32>} : memref<72x512xf32, #tpu.memory_space<vmem>>, vector<8x512xf32>,
    %c0_7 = arith.constant 0 : index
    %c16_8 = arith.constant 16 : index
    %6 = vector.load %arg1[%c0_7, %c16_8] : memref<8x640xf32, #tpu.memory_space<vmem>>, vector<8x512xf32>
    %c24 = arith.constant 24 : index
    %c0_9 = arith.constant 0 : index
    %7 = vector.load %arg5[%c24, %c0_9] : memref<72x512xf32, #tpu.memory_space<vmem>>, vector<8x512xf32>
    tpu.vector_store %arg5[%c24, %c0_9], %6 {strides = array<i32>} : memref<72x512xf32, #tpu.memory_space<vmem>>, vector<8x512xf32>,
    %c0_10 = arith.constant 0 : index
    %c17 = arith.constant 17 : index
    %8 = vector.load %arg1[%c0_10, %c17] : memref<8x640xf32, #tpu.memory_space<vmem>>, vector<8x512xf32>
    %c32 = arith.constant 32 : index
    %c0_11 = arith.constant 0 : index
    %9 = vector.load %arg5[%c32, %c0_11] : memref<72x512xf32, #tpu.memory_space<vmem>>, vector<8x512xf32>
    tpu.vector_store %arg5[%c32, %c0_11], %8 {strides = array<i32>} : memref<72x512xf32, #tpu.memory_space<vmem>>, vector<8x512xf32>,
    %c0_12 = arith.constant 0 : index
    %c18 = arith.constant 18 : index
    %10 = vector.load %arg1[%c0_12, %c18] : memref<8x640xf32, #tpu.memory_space<vmem>>, vector<8x512xf32>
    %c40 = arith.constant 40 : index
    %c0_13 = arith.constant 0 : index
    %11 = vector.load %arg5[%c40, %c0_13] : memref<72x512xf32, #tpu.memory_space<vmem>>, vector<8x512xf32>
    tpu.vector_store %arg5[%c40, %c0_13], %10 {strides = array<i32>} : memref<72x512xf32, #tpu.memory_space<vmem>>, vector<8x512xf32>,
    %c0_14 = arith.constant 0 : index
    %c32_15 = arith.constant 32 : index
    %12 = vector.load %arg1[%c0_14, %c32_15] : memref<8x640xf32, #tpu.memory_space<vmem>>, vector<8x512xf32>
    %c48 = arith.constant 48 : index
    %c0_16 = arith.constant 0 : index
    %13 = vector.load %arg5[%c48, %c0_16] : memref<72x512xf32, #tpu.memory_space<vmem>>, vector<8x512xf32>
    tpu.vector_store %arg5[%c48, %c0_16], %12 {strides = array<i32>} : memref<72x512xf32, #tpu.memory_space<vmem>>, vector<8x512xf32>,
    %c0_17 = arith.constant 0 : index
    %c33 = arith.constant 33 : index
    %14 = vector.load %arg1[%c0_17, %c33] : memref<8x640xf32, #tpu.memory_space<vmem>>, vector<8x512xf32>
    %c56 = arith.constant 56 : index
    %c0_18 = arith.constant 0 : index
    %15 = vector.load %arg5[%c56, %c0_18] : memref<72x512xf32, #tpu.memory_space<vmem>>, vector<8x512xf32>
    tpu.vector_store %arg5[%c56, %c0_18], %14 {strides = array<i32>} : memref<72x512xf32, #tpu.memory_space<vmem>>, vector<8x512xf32>,
    %c0_19 = arith.constant 0 : index
    %c34 = arith.constant 34 : index
    %16 = vector.load %arg1[%c0_19, %c34] : memref<8x640xf32, #tpu.memory_space<vmem>>, vector<8x512xf32>
    %c64 = arith.constant 64 : index
    %c0_20 = arith.constant 0 : index
    %17 = vector.load %arg5[%c64, %c0_20] : memref<72x512xf32, #tpu.memory_space<vmem>>, vector<8x512xf32>
    tpu.vector_store %arg5[%c64, %c0_20], %16 {strides = array<i32>} : memref<72x512xf32, #tpu.memory_space<vmem>>, vector<8x512xf32>,
    %c0_21 = arith.constant 0 : index
    %c0_22 = arith.constant 0 : index
    %18 = vector.load %arg2[%c0_21, %c0_22] : memref<8x72xf32, #tpu.memory_space<vmem>>, vector<8x72xf32>
    %c0_23 = arith.constant 0 : index
    %c0_24 = arith.constant 0 : index
    %19 = vector.load %arg5[%c0_23, %c0_24] : memref<72x512xf32, #tpu.memory_space<vmem>>, vector<72x512xf32>
    %cst = arith.constant dense<0.000000e+00> : vector<8x512xf32>
    %20 = tpu.matmul %18, %19, %cst {dimension_numbers = #tpu.dot_dimension_numbers<[1], [0], [0], [1], [0, 0, 1, 1], [], []>} : vector<8x72xf32>, vector<72x512xf32>, vector<8x512xf32> -> vector<8x512xf32>
    %cst_25 = arith.constant 0.000000e+00 : f32
    %21 = vector.broadcast %cst_25 : f32 to vector<8x512xf32>
    %22 = arith.cmpf oge, %20, %21 : vector<8x512xf32>
    %cst_26 = arith.constant 0.00999999977 : f32
    %23 = vector.broadcast %cst_26 : f32 to vector<8x512xf32>
    %24 = arith.mulf %23, %20 : vector<8x512xf32>
    %25 = arith.select %22, %20, %24 : vector<8x512xi1>, vector<8x512xf32>
    %c0_27 = arith.constant 0 : index
    %c0_28 = arith.constant 0 : index
    %26 = vector.load %arg3[%c0_27, %c0_28] : memref<8x2xf32, #tpu.memory_space<vmem>>, vector<8x1xf32>
    %27 = vector.broadcast %26 : vector<8x1xf32> to vector<8x512xf32>
    %28 = arith.mulf %25, %27 : vector<8x512xf32>
    %c0_29 = arith.constant 0 : index
    %c1_30 = arith.constant 1 : index
    %29 = vector.load %arg3[%c0_29, %c1_30] : memref<8x2xf32, #tpu.memory_space<vmem>>, vector<8x1xf32>
    %30 = vector.broadcast %29 : vector<8x1xf32> to vector<8x512xf32>
    %31 = arith.addf %28, %30 : vector<8x512xf32>
    %c0_31 = arith.constant 0 : index
    %c0_32 = arith.constant 0 : index
    %32 = vector.load %arg4[%c0_31, %c0_32] : memref<8x512xf32, #tpu.memory_space<vmem>>, vector<8x512xf32>
    tpu.vector_store %arg4[%c0_31, %c0_32], %31 {strides = array<i32>} : memref<8x512xf32, #tpu.memory_space<vmem>>, vector<8x512xf32>,
    return
  }
  func.func @transform_0(%arg0: i32) -> (i32, i32) {
    %c0_i32 = arith.constant 0 : i32
    %c0_i32_0 = arith.constant 0 : i32
    %c0_i32_1 = arith.constant 0 : i32
    return %c0_i32, %c0_i32_0 : i32, i32
  }
  func.func @transform_1(%arg0: i32) -> (i32, i32) {
    %c0_i32 = arith.constant 0 : i32
    %c0_i32_0 = arith.constant 0 : i32
    %c0_i32_1 = arith.constant 0 : i32
    return %c0_i32, %c0_i32_0 : i32, i32
  }
  func.func @transform_2(%arg0: i32) -> (i32, i32) {
    %c0_i32 = arith.constant 0 : i32
    %c0_i32_0 = arith.constant 0 : i32
    %c0_i32_1 = arith.constant 0 : i32
    return %c0_i32, %c0_i32_0 : i32, i32
  }
  func.func @transform_3(%arg0: i32) -> (i32, i32) {
    %c0_i32 = arith.constant 0 : i32
    %c0_i32_0 = arith.constant 0 : i32
    %c0_i32_1 = arith.constant 0 : i32
    return %c0_i32, %c0_i32_0 : i32, i32
  }
}

</mosaic_0001>

<llo_original>
// kernel: tpu_custom_call.1
$region0: #{tpu_custom_call.1}
  #allocation0 [shape = 'u32[]', space=smem, size = 0x4, offset = 0x4, fixed_abs, tag = 'smem constant byte address 0x4 - core index']
  #allocation1 [shape = 'u32[144,128]{1,0:T(1,128)}', space=vmem, size = 0x12000, scoped, tag = 'internal scratch']
  #allocation2 [shape = 'f32[72,512]{1,0:T(8,128)}', space=vmem, size = 0x24000, scoped, tag = 'scratch operand']
  %s0 = inlined_call_operand.hbm [shape: f32[8,640], index: 0, kind: input, shape index: {}]
  %s1 = inlined_call_operand.vmem [shape: f32[8,72], index: 1, kind: input, shape index: {}]
  %s2 = inlined_call_operand.vmem [shape: f32[8,2], index: 2, kind: input, shape index: {}]
  %s3 = inlined_call_operand.hbm [shape: f32[8,512], index: 3, kind: output, shape index: {}]
  %s4 = sld [smem:[#allocation0]]
  $region26: #{tpu_custom_call.1} parent=0
    _
  %s6 = ssub.s32 1, %s4
  %s7 = scalar_select 0, %s6, %s4
  $region1: #{tpu_custom_call.1} parent=0
    #allocation3 [shape = 'u8[20480]{0}', space=vmem, size = 0x5000, scoped, tag = 'input window, operand 0, single buffered']
    #allocation4 [shape = 's32[1]{0}', space=sflag, size = 0x4, scoped, tag = 'scoped memory for tpu_custom_call.1']
    #allocation5 [shape = 's32[1]{0}', space=sflag, size = 0x4, scoped, tag = 'scoped memory for tpu_custom_call.1']
    #allocation6 [shape = 'u8[16384]{0}', space=vmem, size = 0x4000, scoped, tag = 'output window, operand 0, single buffered']
    %8 = vsyncpa [#allocation4], 0
    %9 = vsyncpa [#allocation5], 0
    // Predicated region
    $region2: #{tpu_custom_call.1} parent=1 // pred_check
      _
    $region3: #{tpu_custom_call.1} parent=1 // pred_check_branch
      %11 = sbr.rel (0) target = $region5
    $region4: #{tpu_custom_call.1} parent=1 // pred_region
      %s13 = ssub.s32 640, 640
      %14 = vsyncadd [#allocation4], %s13
      %s16 = sshll.u32 [#allocation3], 4
      %s17 = int_to_ptr.vmem [resolvable:$true] %s16
      %19 = dma.hbm_to_vmem [thread:$0]  %s0, 640, %s17, [#allocation4]
    $region5: #{tpu_custom_call.1} parent=1 // pred_fallthru
      _
    // Predicated region
    $region6: #{tpu_custom_call.1} parent=1 // pred_check
      _
    $region7: #{tpu_custom_call.1} parent=1 // pred_check_branch
      %21 = sbr.rel (0) target = $region9
    $region8: #{tpu_custom_call.1} parent=1 // pred_region
      _
    $region9: #{tpu_custom_call.1} parent=1 // pred_fallthru
      _
    // Predicated region
    $region10: #{tpu_custom_call.1} parent=1 // pred_check
      _
    $region11: #{tpu_custom_call.1} parent=1 // pred_check_branch
      %23 = sbr.rel (0) target = $region13
    $region12: #{tpu_custom_call.1} parent=1 // pred_region
      _
    $region13: #{tpu_custom_call.1} parent=1 // pred_fallthru
      _
    // Predicated region
    $region14: #{tpu_custom_call.1} parent=1 // pred_check
      _
    $region15: #{tpu_custom_call.1} parent=1 // pred_check_branch
      %25 = sbr.rel (0) target = $region17
    $region16: #{tpu_custom_call.1} parent=1 // pred_region
      %26 = dma.done [#allocation4], 640
    $region17: #{tpu_custom_call.1} parent=1 // pred_fallthru
      _
    %v27 = vld [vmem:[#allocation3] sm:$0xff]
    %v28 = vld [vmem:[#allocation3 + $0x8] sm:$0xff]
    %v29 = vld [vmem:[#allocation3 + $0x10] sm:$0xff]
    %v30 = vld [vmem:[#allocation3 + $0x18] sm:$0xff]
    %31 = vst [vmem:[#allocation2] sm:$0xff] %v27
    %32 = vst [vmem:[#allocation2 + $0x8] sm:$0xff] %v28
    %33 = vst [vmem:[#allocation2 + $0x10] sm:$0xff] %v29
    %34 = vst [vmem:[#allocation2 + $0x18] sm:$0xff] %v30
    %v35 = vld [vmem:[#allocation3] sm:$0xff]
    %v36 = vld [vmem:[#allocation3 + $0x8] sm:$0xff]
    %v37 = vld [vmem:[#allocation3 + $0x10] sm:$0xff]
    %v38 = vld [vmem:[#allocation3 + $0x18] sm:$0xff]
    %v39 = vld [vmem:[#allocation3 + $0x20] sm:$0xff]
    %45 = vrot.lane.b32.xlu0 %v35, 127
    %v46 = vpop.permute.xlu0 %45
    %47 = vrot.lane.b32.xlu0 %v36, 127
    %v48 = vpop.permute.xlu0 %47
    %49 = vrot.lane.b32.xlu0 %v37, 127
    %v50 = vpop.permute.xlu0 %49
    %51 = vrot.lane.b32.xlu0 %v38, 127
    %v52 = vpop.permute.xlu0 %51
    %53 = vrot.lane.b32.xlu0 %v39, 127
    %v54 = vpop.permute.xlu0 %53
    %vm55 = vcmask 1039360
    %v56 = vsel %vm55, %v46, %v48
    %v57 = vsel %vm55, %v48, %v50
    %v58 = vsel %vm55, %v50, %v52
    %v59 = vsel %vm55, %v52, %v54
    %64 = vst [vmem:[#allocation2 + $0x20] sm:$0xff] %v56
    %65 = vst [vmem:[#allocation2 + $0x28] sm:$0xff] %v57
    %66 = vst [vmem:[#allocation2 + $0x30] sm:$0xff] %v58
    %67 = vst [vmem:[#allocation2 + $0x38] sm:$0xff] %v59
    %v68 = vld [vmem:[#allocation3] sm:$0xff]
    %v69 = vld [vmem:[#allocation3 + $0x8] sm:$0xff]
    %v70 = vld [vmem:[#allocation3 + $0x10] sm:$0xff]
    %v71 = vld [vmem:[#allocation3 + $0x18] sm:$0xff]
    %v72 = vld [vmem:[#allocation3 + $0x20] sm:$0xff]
    %78 = vrot.lane.b32.xlu0 %v68, 126
    %v79 = vpop.permute.xlu0 %78
    %80 = vrot.lane.b32.xlu0 %v69, 126
    %v81 = vpop.permute.xlu0 %80
    %82 = vrot.lane.b32.xlu0 %v70, 126
    %v83 = vpop.permute.xlu0 %82
    %84 = vrot.lane.b32.xlu0 %v71, 126
    %v85 = vpop.permute.xlu0 %84
    %86 = vrot.lane.b32.xlu0 %v72, 126
    %v87 = vpop.permute.xlu0 %86
    %vm88 = vcmask 1031168
    %v89 = vsel %vm88, %v79, %v81
    %v90 = vsel %vm88, %v81, %v83
    %v91 = vsel %vm88, %v83, %v85
    %v92 = vsel %vm88, %v85, %v87
    %97 = vst [vmem:[#allocation2 + $0x40] sm:$0xff] %v89
    %98 = vst [vmem:[#allocation2 + $0x48] sm:$0xff] %v90
    %99 = vst [vmem:[#allocation2 + $0x50] sm:$0xff] %v91
    %100 = vst [vmem:[#allocation2 + $0x58] sm:$0xff] %v92
    %v101 = vld [vmem:[#allocation3] sm:$0xff]
    %v102 = vld [vmem:[#allocation3 + $0x8] sm:$0xff]
    %v103 = vld [vmem:[#allocation3 + $0x10] sm:$0xff]
    %v104 = vld [vmem:[#allocation3 + $0x18] sm:$0xff]
    %v105 = vld [vmem:[#allocation3 + $0x20] sm:$0xff]
    %111 = vrot.lane.b32.xlu0 %v101, 112
    %v112 = vpop.permute.xlu0 %111
    %113 = vrot.lane.b32.xlu0 %v102, 112
    %v114 = vpop.permute.xlu0 %113
    %115 = vrot.lane.b32.xlu0 %v103, 112
    %v116 = vpop.permute.xlu0 %115
    %117 = vrot.lane.b32.xlu0 %v104, 112
    %v118 = vpop.permute.xlu0 %117
    %119 = vrot.lane.b32.xlu0 %v105, 112
    %v120 = vpop.permute.xlu0 %119
    %vm121 = vcmask 916480
    %v122 = vsel %vm121, %v112, %v114
    %v123 = vsel %vm121, %v114, %v116
    %v124 = vsel %vm121, %v116, %v118
    %v125 = vsel %vm121, %v118, %v120
    %130 = vst [vmem:[#allocation2 + $0x60] sm:$0xff] %v122
    %131 = vst [vmem:[#allocation2 + $0x68] sm:$0xff] %v123
    %132 = vst [vmem:[#allocation2 + $0x70] sm:$0xff] %v124
    %133 = vst [vmem:[#allocation2 + $0x78] sm:$0xff] %v125
    %v134 = vld [vmem:[#allocation3] sm:$0xff]
    %v135 = vld [vmem:[#allocation3 + $0x8] sm:$0xff]
    %v136 = vld [vmem:[#allocation3 + $0x10] sm:$0xff]
    %v137 = vld [vmem:[#allocation3 + $0x18] sm:$0xff]
    %v138 = vld [vmem:[#allocation3 + $0x20] sm:$0xff]
    %144 = vrot.lane.b32.xlu0 %v134, 111
    %v145 = vpop.permute.xlu0 %144
    %146 = vrot.lane.b32.xlu0 %v135, 111
    %v147 = vpop.permute.xlu0 %146
    %148 = vrot.lane.b32.xlu0 %v136, 111
    %v149 = vpop.permute.xlu0 %148
    %150 = vrot.lane.b32.xlu0 %v137, 111
    %v151 = vpop.permute.xlu0 %150
    %152 = vrot.lane.b32.xlu0 %v138, 111
    %v153 = vpop.permute.xlu0 %152
    %vm154 = vcmask 908288
    %v155 = vsel %vm154, %v145, %v147
    %v156 = vsel %vm154, %v147, %v149
    %v157 = vsel %vm154, %v149, %v151
    %v158 = vsel %vm154, %v151, %v153
    %163 = vst [vmem:[#allocation2 + $0x80] sm:$0xff] %v155
    %164 = vst [vmem:[#allocation2 + $0x88] sm:$0xff] %v156
    %165 = vst [vmem:[#allocation2 + $0x90] sm:$0xff] %v157
    %166 = vst [vmem:[#allocation2 + $0x98] sm:$0xff] %v158
    %v167 = vld [vmem:[#allocation3] sm:$0xff]
    %v168 = vld [vmem:[#allocation3 + $0x8] sm:$0xff]
    %v169 = vld [vmem:[#allocation3 + $0x10] sm:$0xff]
    %v170 = vld [vmem:[#allocation3 + $0x18] sm:$0xff]
    %v171 = vld [vmem:[#allocation3 + $0x20] sm:$0xff]
    %177 = vrot.lane.b32.xlu0 %v167, 110
    %v178 = vpop.permute.xlu0 %177
    %179 = vrot.lane.b32.xlu0 %v168, 110
    %v180 = vpop.permute.xlu0 %179
    %181 = vrot.lane.b32.xlu0 %v169, 110
    %v182 = vpop.permute.xlu0 %181
    %183 = vrot.lane.b32.xlu0 %v170, 110
    %v184 = vpop.permute.xlu0 %183
    %185 = vrot.lane.b32.xlu0 %v171, 110
    %v186 = vpop.permute.xlu0 %185
    %vm187 = vcmask 900096
    %v188 = vsel %vm187, %v178, %v180
    %v189 = vsel %vm187, %v180, %v182
    %v190 = vsel %vm187, %v182, %v184
    %v191 = vsel %vm187, %v184, %v186
    %196 = vst [vmem:[#allocation2 + $0xa0] sm:$0xff] %v188
    %197 = vst [vmem:[#allocation2 + $0xa8] sm:$0xff] %v189
    %198 = vst [vmem:[#allocation2 + $0xb0] sm:$0xff] %v190
    %199 = vst [vmem:[#allocation2 + $0xb8] sm:$0xff] %v191
    %v200 = vld [vmem:[#allocation3] sm:$0xff]
    %v201 = vld [vmem:[#allocation3 + $0x8] sm:$0xff]
    %v202 = vld [vmem:[#allocation3 + $0x10] sm:$0xff]
    %v203 = vld [vmem:[#allocation3 + $0x18] sm:$0xff]
    %v204 = vld [vmem:[#allocation3 + $0x20] sm:$0xff]
    %210 = vrot.lane.b32.xlu0 %v200, 96
    %v211 = vpop.permute.xlu0 %210
    %212 = vrot.lane.b32.xlu0 %v201, 96
    %v213 = vpop.permute.xlu0 %212
    %214 = vrot.lane.b32.xlu0 %v202, 96
    %v215 = vpop.permute.xlu0 %214
    %216 = vrot.lane.b32.xlu0 %v203, 96
    %v217 = vpop.permute.xlu0 %216
    %218 = vrot.lane.b32.xlu0 %v204, 96
    %v219 = vpop.permute.xlu0 %218
    %vm220 = vcmask 785408
    %v221 = vsel %vm220, %v211, %v213
    %v222 = vsel %vm220, %v213, %v215
    %v223 = vsel %vm220, %v215, %v217
    %v224 = vsel %vm220, %v217, %v219
    %229 = vst [vmem:[#allocation2 + $0xc0] sm:$0xff] %v221
    %230 = vst [vmem:[#allocation2 + $0xc8] sm:$0xff] %v222
    %231 = vst [vmem:[#allocation2 + $0xd0] sm:$0xff] %v223
    %232 = vst [vmem:[#allocation2 + $0xd8] sm:$0xff] %v224
    %v233 = vld [vmem:[#allocation3] sm:$0xff]
    %v234 = vld [vmem:[#allocation3 + $0x8] sm:$0xff]
    %v235 = vld [vmem:[#allocation3 + $0x10] sm:$0xff]
    %v236 = vld [vmem:[#allocation3 + $0x18] sm:$0xff]
    %v237 = vld [vmem:[#allocation3 + $0x20] sm:$0xff]
    %243 = vrot.lane.b32.xlu0 %v233, 95
    %v244 = vpop.permute.xlu0 %243
    %245 = vrot.lane.b32.xlu0 %v234, 95
    %v246 = vpop.permute.xlu0 %245
    %247 = vrot.lane.b32.xlu0 %v235, 95
    %v248 = vpop.permute.xlu0 %247
    %249 = vrot.lane.b32.xlu0 %v236, 95
    %v250 = vpop.permute.xlu0 %249
    %251 = vrot.lane.b32.xlu0 %v237, 95
    %v252 = vpop.permute.xlu0 %251
    %vm253 = vcmask 777216
    %v254 = vsel %vm253, %v244, %v246
    %v255 = vsel %vm253, %v246, %v248
    %v256 = vsel %vm253, %v248, %v250
    %v257 = vsel %vm253, %v250, %v252
    %262 = vst [vmem:[#allocation2 + $0xe0] sm:$0xff] %v254
    %263 = vst [vmem:[#allocation2 + $0xe8] sm:$0xff] %v255
    %264 = vst [vmem:[#allocation2 + $0xf0] sm:$0xff] %v256
    %265 = vst [vmem:[#allocation2 + $0xf8] sm:$0xff] %v257
    %v266 = vld [vmem:[#allocation3] sm:$0xff]
    %v267 = vld [vmem:[#allocation3 + $0x8] sm:$0xff]
    %v268 = vld [vmem:[#allocation3 + $0x10] sm:$0xff]
    %v269 = vld [vmem:[#allocation3 + $0x18] sm:$0xff]
    %v270 = vld [vmem:[#allocation3 + $0x20] sm:$0xff]
    %276 = vrot.lane.b32.xlu0 %v266, 94
    %v277 = vpop.permute.xlu0 %276
    %278 = vrot.lane.b32.xlu0 %v267, 94
    %v279 = vpop.permute.xlu0 %278
    %280 = vrot.lane.b32.xlu0 %v268, 94
    %v281 = vpop.permute.xlu0 %280
    %282 = vrot.lane.b32.xlu0 %v269, 94
    %v283 = vpop.permute.xlu0 %282
    %284 = vrot.lane.b32.xlu0 %v270, 94
    %v285 = vpop.permute.xlu0 %284
    %vm286 = vcmask 769024
    %v287 = vsel %vm286, %v277, %v279
    %v288 = vsel %vm286, %v279, %v281
    %v289 = vsel %vm286, %v281, %v283
    %v290 = vsel %vm286, %v283, %v285
    %295 = vst [vmem:[#allocation2 + $0x100] sm:$0xff] %v287
    %296 = vst [vmem:[#allocation2 + $0x108] sm:$0xff] %v288
    %297 = vst [vmem:[#allocation2 + $0x110] sm:$0xff] %v289
    %298 = vst [vmem:[#allocation2 + $0x118] sm:$0xff] %v290
    %v299 = vld [vmem:[%s1] sm:$0xff]
    %v300 = vld [vmem:[#allocation2] sm:$0xff]
    %v301 = vld [vmem:[#allocation2 + $0x8] sm:$0xff]
    %v302 = vld [vmem:[#allocation2 + $0x10] sm:$0xff]
    %v303 = vld [vmem:[#allocation2 + $0x18] sm:$0xff]
    %v304 = vld [vmem:[#allocation2 + $0x20] sm:$0xff]
    %v305 = vld [vmem:[#allocation2 + $0x28] sm:$0xff]
    %v306 = vld [vmem:[#allocation2 + $0x30] sm:$0xff]
    %v307 = vld [vmem:[#allocation2 + $0x38] sm:$0xff]
    %v308 = vld [vmem:[#allocation2 + $0x40] sm:$0xff]
    %v309 = vld [vmem:[#allocation2 + $0x48] sm:$0xff]
    %v310 = vld [vmem:[#allocation2 + $0x50] sm:$0xff]
    %v311 = vld [vmem:[#allocation2 + $0x58] sm:$0xff]
    %v312 = vld [vmem:[#allocation2 + $0x60] sm:$0xff]
    %v313 = vld [vmem:[#allocation2 + $0x68] sm:$0xff]
    %v314 = vld [vmem:[#allocation2 + $0x70] sm:$0xff]
    %v315 = vld [vmem:[#allocation2 + $0x78] sm:$0xff]
    %v316 = vld [vmem:[#allocation2 + $0x80] sm:$0xff]
    %v317 = vld [vmem:[#allocation2 + $0x88] sm:$0xff]
    %v318 = vld [vmem:[#allocation2 + $0x90] sm:$0xff]
    %v319 = vld [vmem:[#allocation2 + $0x98] sm:$0xff]
    %v320 = vld [vmem:[#allocation2 + $0xa0] sm:$0xff]
    %v321 = vld [vmem:[#allocation2 + $0xa8] sm:$0xff]
    %v322 = vld [vmem:[#allocation2 + $0xb0] sm:$0xff]
    %v323 = vld [vmem:[#allocation2 + $0xb8] sm:$0xff]
    %v324 = vld [vmem:[#allocation2 + $0xc0] sm:$0xff]
    %v325 = vld [vmem:[#allocation2 + $0xc8] sm:$0xff]
    %v326 = vld [vmem:[#allocation2 + $0xd0] sm:$0xff]
    %v327 = vld [vmem:[#allocation2 + $0xd8] sm:$0xff]
    %v328 = vld [vmem:[#allocation2 + $0xe0] sm:$0xff]
    %v329 = vld [vmem:[#allocation2 + $0xe8] sm:$0xff]
    %v330 = vld [vmem:[#allocation2 + $0xf0] sm:$0xff]
    %v331 = vld [vmem:[#allocation2 + $0xf8] sm:$0xff]
    %v332 = vld [vmem:[#allocation2 + $0x100] sm:$0xff]
    %v333 = vld [vmem:[#allocation2 + $0x108] sm:$0xff]
    %v334 = vld [vmem:[#allocation2 + $0x110] sm:$0xff]
    %v335 = vld [vmem:[#allocation2 + $0x118] sm:$0xff]
    %vm336 = vcmask 588800
    %v338 = vsel %vm336, %v299, 0
    %340 = vmatprep.subr.mxu0 %v301
    %341 = vmatpush1.msra.mxu0 %v300
    %342 = vmatprep.subr.mxu0 %v305
    %343 = vmatpush1.msra.mxu0 %v304
    %344 = vmatprep.subr.mxu0 %v309
    %345 = vmatpush1.msra.mxu0 %v308
    %346 = vmatprep.subr.mxu0 %v313
    %347 = vmatpush1.msra.mxu0 %v312
    %348 = vmatprep.subr.mxu0 %v317
    %349 = vmatpush1.msra.mxu0 %v316
    %350 = vmatprep.subr.mxu0 %v321
    %351 = vmatpush1.msra.mxu0 %v320
    %352 = vmatprep.subr.mxu0 %v325
    %353 = vmatpush1.msra.mxu0 %v324
    %354 = vmatprep.subr.mxu0 %v329
    %355 = vmatpush1.msra.mxu0 %v328
    %356 = vmatprep.subr.mxu0 %v333
    %357 = vmatpush1.msra.mxu0 %v332
    %358 = vmatprep.subr.mxu0 0.0
    %359 = vmatpush1.msra.mxu0 0.0
    %360 = vmatprep.subr.mxu0 0.0
    %361 = vmatpush1.msra.mxu0 0.0
    %362 = vmatprep.subr.mxu0 0.0
    %363 = vmatpush1.msra.mxu0 0.0
    %364 = vmatprep.subr.mxu0 0.0
    %365 = vmatpush1.msra.mxu0 0.0
    %366 = vmatprep.subr.mxu0 0.0
    %367 = vmatpush1.msra.mxu0 0.0
    %368 = vmatprep.subr.mxu0 0.0
    %369 = vmatpush1.msra.mxu0 0.0
    %370 = vmatprep.subr.mxu0 0.0
    %371 = vmatpush1.msra.mxu0 0.0
    %372 = vmatprep.subr.mxu0 0.0
    %373 = vmatpush1.msra.mxu0 0.0
    %374 = vmatprep.subr.mxu0 0.0
    %375 = vmatpush1.msra.mxu0 0.0
    %376 = vmatprep.subr.mxu0 0.0
    %377 = vmatpush1.msra.mxu0 0.0
    %378 = vmatprep.subr.mxu0 0.0
    %379 = vmatpush1.msra.mxu0 0.0
    %380 = vmatprep.subr.mxu0 0.0
    %381 = vmatpush1.msra.mxu0 0.0
    %382 = vmatprep.subr.mxu0 0.0
    %383 = vmatpush1.msra.mxu0 0.0
    %384 = vmatprep.subr.mxu0 0.0
    %385 = vmatpush1.msra.mxu0 0.0
    %386 = vmatprep.subr.mxu0 0.0
    %387 = vmatpush1.msra.mxu0 0.0
    %388 = vmatprep.subr.mxu0 0.0
    %389 = vmatpush1.msra.mxu0 0.0
    %390 = vmatprep.subr.mxu0 0.0
    %391 = vmatpush1.msra.mxu0 0.0
    %392 = vmatprep.subr.mxu0 0.0
    %393 = vmatpush1.msra.mxu0 0.0
    %394 = vmatprep.subr.mxu0 0.0
    %395 = vmatpush1.msra.mxu0 0.0
    %396 = vmatprep.subr.mxu0 0.0
    %397 = vmatpush1.msra.mxu0 0.0
    %398 = vmatprep.subr.mxu0 0.0
    %399 = vmatpush1.msra.mxu0 0.0
    %400 = vmatprep.subr.mxu0 0.0
    %401 = vmatpush1.msra.mxu0 0.0
    %402 = vmatprep.subr.mxu0 0.0
    %403 = vmatpush1.msra.mxu0 0.0
    %404 = vmatprep.mubr.f32.mxu0 0.0
    %405 = vmatmul.mubr.f32.gmra.mrb[0].mxu0 %v338
    %v406 = vpop.f32.mrb[0].mxu0
    %v407 = vadd.f32 0.0, %v406
    %v408 = vpop.f32.mrb[0].mxu0
    %v409 = vadd.f32 0.0, %v408
    %410 = vdwg.mxu0
    %411 = vmatprep.subr.mxu0 %v303
    %412 = vmatpush1.msra.mxu0 %v302
    %413 = vmatprep.subr.mxu0 %v307
    %414 = vmatpush1.msra.mxu0 %v306
    %415 = vmatprep.subr.mxu0 %v311
    %416 = vmatpush1.msra.mxu0 %v310
    %417 = vmatprep.subr.mxu0 %v315
    %418 = vmatpush1.msra.mxu0 %v314
    %419 = vmatprep.subr.mxu0 %v319
    %420 = vmatpush1.msra.mxu0 %v318
    %421 = vmatprep.subr.mxu0 %v323
    %422 = vmatpush1.msra.mxu0 %v322
    %423 = vmatprep.subr.mxu0 %v327
    %424 = vmatpush1.msra.mxu0 %v326
    %425 = vmatprep.subr.mxu0 %v331
    %426 = vmatpush1.msra.mxu0 %v330
    %427 = vmatprep.subr.mxu0 %v335
    %428 = vmatpush1.msra.mxu0 %v334
    %429 = vmatprep.subr.mxu0 0.0
    %430 = vmatpush1.msra.mxu0 0.0
    %431 = vmatprep.subr.mxu0 0.0
    %432 = vmatpush1.msra.mxu0 0.0
    %433 = vmatprep.subr.mxu0 0.0
    %434 = vmatpush1.msra.mxu0 0.0
    %435 = vmatprep.subr.mxu0 0.0
    %436 = vmatpush1.msra.mxu0 0.0
    %437 = vmatprep.subr.mxu0 0.0
    %438 = vmatpush1.msra.mxu0 0.0
    %439 = vmatprep.subr.mxu0 0.0
    %440 = vmatpush1.msra.mxu0 0.0
    %441 = vmatprep.subr.mxu0 0.0
    %442 = vmatpush1.msra.mxu0 0.0
    %443 = vmatprep.subr.mxu0 0.0
    %444 = vmatpush1.msra.mxu0 0.0
    %445 = vmatprep.subr.mxu0 0.0
    %446 = vmatpush1.msra.mxu0 0.0
    %447 = vmatprep.subr.mxu0 0.0
    %448 = vmatpush1.msra.mxu0 0.0
    %449 = vmatprep.subr.mxu0 0.0
    %450 = vmatpush1.msra.mxu0 0.0
    %451 = vmatprep.subr.mxu0 0.0
    %452 = vmatpush1.msra.mxu0 0.0
    %453 = vmatprep.subr.mxu0 0.0
    %454 = vmatpush1.msra.mxu0 0.0
    %455 = vmatprep.subr.mxu0 0.0
    %456 = vmatpush1.msra.mxu0 0.0
    %457 = vmatprep.subr.mxu0 0.0
    %458 = vmatpush1.msra.mxu0 0.0
    %459 = vmatprep.subr.mxu0 0.0
    %460 = vmatpush1.msra.mxu0 0.0
    %461 = vmatprep.subr.mxu0 0.0
    %462 = vmatpush1.msra.mxu0 0.0
    %463 = vmatprep.subr.mxu0 0.0
    %464 = vmatpush1.msra.mxu0 0.0
    %465 = vmatprep.subr.mxu0 0.0
    %466 = vmatpush1.msra.mxu0 0.0
    %467 = vmatprep.subr.mxu0 0.0
    %468 = vmatpush1.msra.mxu0 0.0
    %469 = vmatprep.subr.mxu0 0.0
    %470 = vmatpush1.msra.mxu0 0.0
    %471 = vmatprep.subr.mxu0 0.0
    %472 = vmatpush1.msra.mxu0 0.0
    %473 = vmatprep.subr.mxu0 0.0
    %474 = vmatpush1.msra.mxu0 0.0
    %475 = vmatprep.mubr.f32.mxu0 0.0
    %476 = vmatmul.mubr.f32.gmra.mrb[0].mxu0 %v338
    %v477 = vpop.f32.mrb[0].mxu0
    %v478 = vadd.f32 0.0, %v477
    %v479 = vpop.f32.mrb[0].mxu0
    %v480 = vadd.f32 0.0, %v479
    %481 = vdwg.mxu0
    %vm482 = vcmp.ge.f32.partialorder %v407, 0.0
    %vm483 = vcmp.ge.f32.partialorder %v409, 0.0
    %vm484 = vcmp.ge.f32.partialorder %v478, 0.0
    %vm485 = vcmp.ge.f32.partialorder %v480, 0.0
    %v486 = vmul.f32 %v407, 0.01
    %v487 = vmul.f32 %v409, 0.01
    %v488 = vmul.f32 %v478, 0.01
    %v489 = vmul.f32 %v480, 0.01
    %v490 = vsel %vm482, %v407, %v486
    %v491 = vsel %vm483, %v409, %v487
    %v492 = vsel %vm484, %v478, %v488
    %v493 = vsel %vm485, %v480, %v489
    %v494 = vld [vmem:[%s2] sm:$0xff]
    %496 = vset.pattern.permute.xlu0 0
    %497 = vperm.xlu0 %496, %v494
    %v498 = vpop.permute.xlu0 %497
    %v500 = vmul.f32 %v490, %v498
    %v501 = vmul.f32 %v491, %v498
    %v502 = vmul.f32 %v492, %v498
    %v503 = vmul.f32 %v493, %v498
    %504 = vset.pattern.permute.xlu0 1
    %505 = vperm.xlu0 %504, %v494
    %v506 = vpop.permute.xlu0 %505
    %v508 = vadd.f32 %v500, %v506
    %v509 = vadd.f32 %v501, %v506
    %v510 = vadd.f32 %v502, %v506
    %v511 = vadd.f32 %v503, %v506
    %512 = vst [vmem:[#allocation6] sm:$0xff] %v508
    %513 = vst [vmem:[#allocation6 + $0x8] sm:$0xff] %v509
    %514 = vst [vmem:[#allocation6 + $0x10] sm:$0xff] %v510
    %515 = vst [vmem:[#allocation6 + $0x18] sm:$0xff] %v511
    // Predicated region
    $region18: #{tpu_custom_call.1} parent=1 // pred_check
      _
    $region19: #{tpu_custom_call.1} parent=1 // pred_check_branch
      %517 = sbr.rel (0) target = $region21
    $region20: #{tpu_custom_call.1} parent=1 // pred_region
      %s519 = ssub.s32 512, 512
      %520 = vsyncadd [#allocation5], %s519
      %s522 = sshll.u32 [#allocation6], 4
      %s523 = int_to_ptr.vmem [resolvable:$true] %s522
      %525 = dma.vmem_to_hbm [thread:$0]  %s523, 512, %s3, [#allocation5]
    $region21: #{tpu_custom_call.1} parent=1 // pred_fallthru
      _
    // Predicated region
    $region22: #{tpu_custom_call.1} parent=1 // pred_check
      _
    $region23: #{tpu_custom_call.1} parent=1 // pred_check_branch
      %527 = sbr.rel (0) target = $region25
    $region24: #{tpu_custom_call.1} parent=1 // pred_region
      %528 = dma.done [#allocation5], 512
    $region25: #{tpu_custom_call.1} parent=1 // pred_fallthru
      _
    %529 = vsyncpa [#allocation4], 1
    %530 = vsyncpa [#allocation5], 1

</llo_original>
